<compile_context>
chip_gen: v7x
topology: tpu7x:2x2x1
jax: 0.10.0
libtpu: 0.0.40
codegen_flags: <defaults>
</compile_context>

<pallas_src>
import math

import jax
import jax.numpy as jnp
import numpy as np
from jax.experimental import pallas as pl
from jax.experimental.pallas import tpu as pltpu


def _round_up(x, m):
    return (x + m - 1) // m * m


# ----------------------------------------------------------------------------
# Pallas kernel: one grid step == one tile of batch rows, all dims lane-dense.
# ----------------------------------------------------------------------------
def time_embedding_kernel(t_ref, freqs_ref, phase_off_ref,
                          w1_ref, b1_ref, w2_ref, b2_ref, out_ref):
    t = t_ref[...]                                             # (TB, 1) f32
    # Sinusoidal embedding, cos/sin fused: cos(t*f) | sin(t*f) == cos(t*f - pi/2)
    phase = t * freqs_ref[...] + phase_off_ref[...]            # (TB, D)
    emb = jnp.cos(phase)                                       # (TB, D) f32

    # Linear(n_embd -> 4*n_embd): bf16 MXU inputs, f32 accumulation.
    h = jnp.dot(emb.astype(jnp.bfloat16), w1_ref[...],
                preferred_element_type=jnp.float32) + b1_ref[...]   # (TB, 4D)

    # Swish: x * sigmoid(x); exp + approx reciprocal both go to the EUP.
    h = h * pl.reciprocal(1.0 + jnp.exp(-h), approx=True)

    # Linear(4*n_embd -> n_embd)
    out = jnp.dot(h.astype(jnp.bfloat16), w2_ref[...],
                  preferred_element_type=jnp.float32) + b2_ref[...]  # (TB, D)
    out_ref[...] = out.astype(out_ref.dtype)


# ----------------------------------------------------------------------------
# Wrapper: parameter plumbing (PyTorch layout -> lane-dense kernel layout).
# ----------------------------------------------------------------------------
def time_embedding(time, params, *, block_b=256):
    time = time.astype(jnp.float32).reshape(-1, 1)             # (B, 1)
    B = time.shape[0]
    d_half = params["freqs"].shape[0]
    D = 2 * d_half
    H = 4 * D

    # Batch tile: multiple of 8 sublanes; pad the batch if needed.
    TB = min(block_b, _round_up(B, 8))
    B_pad = _round_up(B, TB)
    if B_pad != B:
        time = jnp.pad(time, ((0, B_pad - B), (0, 0)))

    freqs = params["freqs"].astype(jnp.float32)
    # [f, f] and [0, -pi/2]: lets cos() produce the cos|sin concat in one shot.
    freqs_row = jnp.concatenate([freqs, freqs]).reshape(1, D)
    phase_off = jnp.concatenate(
        [jnp.zeros((d_half,), jnp.float32),
         jnp.full((d_half,), -0.5 * math.pi, jnp.float32)]).reshape(1, D)

    # PyTorch Linear weight is (out, in); transpose so the kernel does x @ W.
    w1 = params["w1"].T.astype(jnp.bfloat16)                   # (D, 4D)
    b1 = params["b1"].reshape(1, H).astype(jnp.float32)
    w2 = params["w2"].T.astype(jnp.bfloat16)                   # (4D, D)
    b2 = params["b2"].reshape(1, D).astype(jnp.float32)

    const = lambda i: (0, 0)
    out = pl.pallas_call(
        time_embedding_kernel,
        out_shape=jax.ShapeDtypeStruct((B_pad, D), jnp.float32),
        grid_spec=pltpu.PrefetchScalarGridSpec(
            num_scalar_prefetch=0,
            grid=(B_pad // TB,),
            in_specs=[pl.BlockSpec((TB, 1), lambda i: (i, 0)),   # time column
                      pl.BlockSpec((1, D), const),               # freqs (dup)
                      pl.BlockSpec((1, D), const),               # phase offset
                      pl.BlockSpec((D, H), const),               # w1
                      pl.BlockSpec((1, H), const),               # b1
                      pl.BlockSpec((H, D), const),               # w2
                      pl.BlockSpec((1, D), const)],              # b2
            out_specs=pl.BlockSpec((TB, D), lambda i: (i, 0))),
        compiler_params=pltpu.CompilerParams(
            dimension_semantics=("parallel",)),
    )(time, freqs_row, phase_off, w1, b1, w2, b2)

    return out[:B]


# ----------------------------------------------------------------------------
# Pure-JAX reference (mirrors the PyTorch forward) for a correctness check.
# ----------------------------------------------------------------------------
def time_embedding_reference(time, params):
    time = time.astype(jnp.float32)
    freqs = params["freqs"]
    x = time[:, None] * freqs[None]                            # (B, D/2)
    x = jnp.concatenate([jnp.cos(x), jnp.sin(x)], axis=-1)     # (B, D)
    h = x @ params["w1"].T + params["b1"]
    h = h * jax.nn.sigmoid(h)                                  # Swish
    return h @ params["w2"].T + params["b2"]


def init_params(key, n_embd):
    ks = jax.random.split(key, 4)
    s = 0.05
    base = math.log(10000.0) / (n_embd // 2)
    freqs = jnp.exp(jnp.arange(n_embd // 2, dtype=jnp.float32) * -base)
    return {
        "freqs": freqs,                                             # buffer
        "w1": s * jax.random.normal(ks[0], (4 * n_embd, n_embd), jnp.float32),
        "b1": s * jax.random.normal(ks[1], (4 * n_embd,), jnp.float32),
        "w2": s * jax.random.normal(ks[2], (n_embd, 4 * n_embd), jnp.float32),
        "b2": s * jax.random.normal(ks[3], (n_embd,), jnp.float32),
    }


if __name__ == "__main__":
    key = jax.random.PRNGKey(0)
    kt, kp = jax.random.split(key)

    B, n_embd = 16, 128          # n_embd=128 keeps the lane axis fully dense
    time = jax.random.uniform(kt, (B,), jnp.float32, 0.0, 1000.0)
    params = init_params(kp, n_embd)

    out = jax.block_until_ready(time_embedding(time, params))
    ref = time_embedding_reference(time, params)

    # bf16 MXU inputs with f32 accumulation -> a few-e-3 deviation budget.
    np.testing.assert_allclose(np.asarray(out), np.asarray(ref),
                               rtol=2e-2, atol=2e-2)
    print("KERNEL_OK")
</pallas_src>

<mosaic_0001>
module attributes {stable_mosaic.version = 11 : i64} {
  func.func @time_embedding_kernel(%arg0: i32, %arg1: memref<16x1xf32, #tpu.memory_space<vmem>>, %arg2: memref<1x128xf32, #tpu.memory_space<vmem>>, %arg3: memref<1x128xf32, #tpu.memory_space<vmem>>, %arg4: memref<128x512xbf16, #tpu.memory_space<vmem>>, %arg5: memref<1x512xf32, #tpu.memory_space<vmem>>, %arg6: memref<512x128xbf16, #tpu.memory_space<vmem>>, %arg7: memref<1x128xf32, #tpu.memory_space<vmem>>, %arg8: memref<16x128xf32, #tpu.memory_space<vmem>>) attributes {dimension_semantics = [#tpu.dimension_semantics<parallel>], iteration_bounds = array<i64: 1>, scalar_prefetch = 0 : i64, scratch_operands = 0 : i64, tpu.core_type = #tpu.core_type<tc>, window_params = [{transform_indices = @transform_0, window_bounds = array<i64: 16, 1>}, {pipeline_mode = #tpu.pipeline_mode<synchronous>, transform_indices = @transform_1, window_bounds = array<i64: 1, 128>}, {pipeline_mode = #tpu.pipeline_mode<synchronous>, transform_indices = @transform_2, window_bounds = array<i64: 1, 128>}, {pipeline_mode = #tpu.pipeline_mode<synchronous>, transform_indices = @transform_3, window_bounds = array<i64: 128, 512>}, {pipeline_mode = #tpu.pipeline_mode<synchronous>, transform_indices = @transform_4, window_bounds = array<i64: 1, 512>}, {pipeline_mode = #tpu.pipeline_mode<synchronous>, transform_indices = @transform_5, window_bounds = array<i64: 512, 128>}, {pipeline_mode = #tpu.pipeline_mode<synchronous>, transform_indices = @transform_6, window_bounds = array<i64: 1, 128>}, {transform_indices = @transform_7, window_bounds = array<i64: 16, 128>}]} {
    %c0 = arith.constant 0 : index
    %c0_0 = arith.constant 0 : index
    %0 = vector.load %arg1[%c0, %c0_0] : memref<16x1xf32, #tpu.memory_space<vmem>>, vector<16x1xf32>
    %c0_1 = arith.constant 0 : index
    %c0_2 = arith.constant 0 : index
    %1 = vector.load %arg2[%c0_1, %c0_2] : memref<1x128xf32, #tpu.memory_space<vmem>>, vector<1x128xf32>
    %2 = vector.broadcast %0 : vector<16x1xf32> to vector<16x128xf32>
    %3 = vector.broadcast %1 : vector<1x128xf32> to vector<16x128xf32>
    %4 = arith.mulf %2, %3 : vector<16x128xf32>
    %c0_3 = arith.constant 0 : index
    %c0_4 = arith.constant 0 : index
    %5 = vector.load %arg3[%c0_3, %c0_4] : memref<1x128xf32, #tpu.memory_space<vmem>>, vector<1x128xf32>
    %6 = vector.broadcast %5 : vector<1x128xf32> to vector<16x128xf32>
    %7 = arith.addf %4, %6 : vector<16x128xf32>
    %8 = math.cos %7 : vector<16x128xf32>
    %9 = arith.truncf %8 : vector<16x128xf32> to vector<16x128xbf16>
    %c0_5 = arith.constant 0 : index
    %c0_6 = arith.constant 0 : index
    %10 = vector.load %arg4[%c0_5, %c0_6] : memref<128x512xbf16, #tpu.memory_space<vmem>>, vector<128x512xbf16>
    %cst = arith.constant dense<0.000000e+00> : vector<16x512xf32>
    %11 = tpu.matmul %9, %10, %cst {dimension_numbers = #tpu.dot_dimension_numbers<[1], [0], [0], [1], [0, 0, 1, 1], [], []>} : vector<16x128xbf16>, vector<128x512xbf16>, vector<16x512xf32> -> vector<16x512xf32>
    %c0_7 = arith.constant 0 : index
    %c0_8 = arith.constant 0 : index
    %12 = vector.load %arg5[%c0_7, %c0_8] : memref<1x512xf32, #tpu.memory_space<vmem>>, vector<1x512xf32>
    %13 = vector.broadcast %12 : vector<1x512xf32> to vector<16x512xf32>
    %14 = arith.addf %11, %13 : vector<16x512xf32>
    %cst_9 = arith.constant 0.000000e+00 : f32
    %15 = vector.broadcast %cst_9 : f32 to vector<16x512xf32>
    %16 = arith.subf %15, %14 : vector<16x512xf32>
    %17 = math.exp %16 : vector<16x512xf32>
    %cst_10 = arith.constant 1.000000e+00 : f32
    %18 = vector.broadcast %cst_10 : f32 to vector<16x512xf32>
    %19 = arith.addf %18, %17 : vector<16x512xf32>
    %20 = tpu.reciprocal %19 {approx = true} : vector<16x512xf32> -> vector<16x512xf32>
    %21 = arith.mulf %14, %20 : vector<16x512xf32>
    %22 = arith.truncf %21 : vector<16x512xf32> to vector<16x512xbf16>
    %c0_11 = arith.constant 0 : index
    %c0_12 = arith.constant 0 : index
    %23 = vector.load %arg6[%c0_11, %c0_12] : memref<512x128xbf16, #tpu.memory_space<vmem>>, vector<512x128xbf16>
    %cst_13 = arith.constant dense<0.000000e+00> : vector<16x128xf32>
    %24 = tpu.matmul %22, %23, %cst_13 {dimension_numbers = #tpu.dot_dimension_numbers<[1], [0], [0], [1], [0, 0, 1, 1], [], []>} : vector<16x512xbf16>, vector<512x128xbf16>, vector<16x128xf32> -> vector<16x128xf32>
    %c0_14 = arith.constant 0 : index
    %c0_15 = arith.constant 0 : index
    %25 = vector.load %arg7[%c0_14, %c0_15] : memref<1x128xf32, #tpu.memory_space<vmem>>, vector<1x128xf32>
    %26 = vector.broadcast %25 : vector<1x128xf32> to vector<16x128xf32>
    %27 = arith.addf %24, %26 : vector<16x128xf32>
    %c0_16 = arith.constant 0 : index
    %c0_17 = arith.constant 0 : index
    %28 = vector.load %arg8[%c0_16, %c0_17] : memref<16x128xf32, #tpu.memory_space<vmem>>, vector<16x128xf32>
    tpu.vector_store %arg8[%c0_16, %c0_17], %27 {strides = array<i32>} : memref<16x128xf32, #tpu.memory_space<vmem>>, vector<16x128xf32>,
    return
  }
  func.func @transform_0(%arg0: i32) -> (i32, i32) {
    %c0_i32 = arith.constant 0 : i32
    %c0_i32_0 = arith.constant 0 : i32
    return %arg0, %c0_i32 : i32, i32
  }
  func.func @transform_1(%arg0: i32) -> (i32, i32) {
    %c0_i32 = arith.constant 0 : i32
    %c0_i32_0 = arith.constant 0 : i32
    %c0_i32_1 = arith.constant 0 : i32
    return %c0_i32, %c0_i32_0 : i32, i32
  }
  func.func @transform_2(%arg0: i32) -> (i32, i32) {
    %c0_i32 = arith.constant 0 : i32
    %c0_i32_0 = arith.constant 0 : i32
    %c0_i32_1 = arith.constant 0 : i32
    return %c0_i32, %c0_i32_0 : i32, i32
  }
  func.func @transform_3(%arg0: i32) -> (i32, i32) {
    %c0_i32 = arith.constant 0 : i32
    %c0_i32_0 = arith.constant 0 : i32
    %c0_i32_1 = arith.constant 0 : i32
    return %c0_i32, %c0_i32_0 : i32, i32
  }
  func.func @transform_4(%arg0: i32) -> (i32, i32) {
    %c0_i32 = arith.constant 0 : i32
    %c0_i32_0 = arith.constant 0 : i32
    %c0_i32_1 = arith.constant 0 : i32
    return %c0_i32, %c0_i32_0 : i32, i32
  }
  func.func @transform_5(%arg0: i32) -> (i32, i32) {
    %c0_i32 = arith.constant 0 : i32
    %c0_i32_0 = arith.constant 0 : i32
    %c0_i32_1 = arith.constant 0 : i32
    return %c0_i32, %c0_i32_0 : i32, i32
  }
  func.func @transform_6(%arg0: i32) -> (i32, i32) {
    %c0_i32 = arith.constant 0 : i32
    %c0_i32_0 = arith.constant 0 : i32
    %c0_i32_1 = arith.constant 0 : i32
    return %c0_i32, %c0_i32_0 : i32, i32
  }
  func.func @transform_7(%arg0: i32) -> (i32, i32) {
    %c0_i32 = arith.constant 0 : i32
    %c0_i32_0 = arith.constant 0 : i32
    return %arg0, %c0_i32 : i32, i32
  }
}

</mosaic_0001>

<llo_original>
// kernel: tpu_custom_call.1
$region0: #{tpu_custom_call.1}
  #allocation0 [shape = 'u32[]', space=smem, size = 0x4, offset = 0x4, fixed_abs, tag = 'smem constant byte address 0x4 - core index']
  #allocation1 [shape = 'u32[144,128]{1,0:T(1,128)}', space=vmem, size = 0x12000, scoped, tag = 'internal scratch']
  %s0 = inlined_call_operand.vmem [shape: f32[16,1], index: 0, kind: input, shape index: {}]
  %s1 = inlined_call_operand.vmem [shape: f32[1,128], index: 1, kind: input, shape index: {}]
  %s2 = inlined_call_operand.vmem [shape: f32[1,128], index: 2, kind: input, shape index: {}]
  %s3 = inlined_call_operand.hbm [shape: bf16[128,512], index: 3, kind: input, shape index: {}]
  %s4 = inlined_call_operand.vmem [shape: f32[1,512], index: 4, kind: input, shape index: {}]
  %s5 = inlined_call_operand.hbm [shape: bf16[512,128], index: 5, kind: input, shape index: {}]
  %s6 = inlined_call_operand.vmem [shape: f32[1,128], index: 6, kind: input, shape index: {}]
  %s7 = inlined_call_operand.hbm [shape: f32[16,128], index: 7, kind: output, shape index: {}]
  %s8 = sld [smem:[#allocation0]]
  $region46: #{tpu_custom_call.1} parent=0
    _
  %s10 = ssub.s32 1, %s8
  %s11 = scalar_select 0, %s10, %s8
  $region1: #{tpu_custom_call.1} parent=0
    #allocation2 [shape = 'u8[131072]{0}', space=vmem, size = 0x20000, scoped, tag = 'input window, operand 3, single buffered']
    #allocation3 [shape = 's32[1]{0}', space=sflag, size = 0x4, scoped, tag = 'scoped memory for tpu_custom_call.1']
    #allocation4 [shape = 's32[1]{0}', space=sflag, size = 0x4, scoped, tag = 'scoped memory for tpu_custom_call.1']
    #allocation5 [shape = 'u8[131072]{0}', space=vmem, size = 0x20000, scoped, tag = 'input window, operand 5, single buffered']
    #allocation6 [shape = 's32[1]{0}', space=sflag, size = 0x4, scoped, tag = 'scoped memory for tpu_custom_call.1']
    #allocation7 [shape = 'u8[8192]{0}', space=vmem, size = 0x2000, scoped, tag = 'output window, operand 0, single buffered']
    %12 = vsyncpa [#allocation3], 0
    %13 = vsyncpa [#allocation6], 0
    %14 = vsyncpa [#allocation4], 0
    // Predicated region
    $region2: #{tpu_custom_call.1} parent=1 // pred_check
      _
    $region3: #{tpu_custom_call.1} parent=1 // pred_check_branch
      %16 = sbr.rel (0) target = $region5
    $region4: #{tpu_custom_call.1} parent=1 // pred_region
      _
    $region5: #{tpu_custom_call.1} parent=1 // pred_fallthru
      _
    // Predicated region
    $region6: #{tpu_custom_call.1} parent=1 // pred_check
      _
    $region7: #{tpu_custom_call.1} parent=1 // pred_check_branch
      %18 = sbr.rel (0) target = $region9
    $region8: #{tpu_custom_call.1} parent=1 // pred_region
      _
    $region9: #{tpu_custom_call.1} parent=1 // pred_fallthru
      _
    // Predicated region
    $region10: #{tpu_custom_call.1} parent=1 // pred_check
      _
    $region11: #{tpu_custom_call.1} parent=1 // pred_check_branch
      %20 = sbr.rel (0) target = $region13
    $region12: #{tpu_custom_call.1} parent=1 // pred_region
      _
    $region13: #{tpu_custom_call.1} parent=1 // pred_fallthru
      _
    // Predicated region
    $region14: #{tpu_custom_call.1} parent=1 // pred_check
      _
    $region15: #{tpu_custom_call.1} parent=1 // pred_check_branch
      %22 = sbr.rel (0) target = $region17
    $region16: #{tpu_custom_call.1} parent=1 // pred_region
      %s24 = ssub.s32 4096, 4096
      %25 = vsyncadd [#allocation3], %s24
      %s26 = sshll.u32 [#allocation2], 4
      %s27 = int_to_ptr.vmem [resolvable:$true] %s26
      %32 = dma.hbm_to_vmem [thread:$0]  %s3, 4096, %s27, [#allocation3], 256, 256, 16
    $region17: #{tpu_custom_call.1} parent=1 // pred_fallthru
      _
    // Predicated region
    $region18: #{tpu_custom_call.1} parent=1 // pred_check
      _
    $region19: #{tpu_custom_call.1} parent=1 // pred_check_branch
      %34 = sbr.rel (0) target = $region21
    $region20: #{tpu_custom_call.1} parent=1 // pred_region
      _
    $region21: #{tpu_custom_call.1} parent=1 // pred_fallthru
      _
    // Predicated region
    $region22: #{tpu_custom_call.1} parent=1 // pred_check
      _
    $region23: #{tpu_custom_call.1} parent=1 // pred_check_branch
      %36 = sbr.rel (0) target = $region25
    $region24: #{tpu_custom_call.1} parent=1 // pred_region
      %s38 = ssub.s32 4096, 4096
      %39 = vsyncadd [#allocation6], %s38
      %s40 = sshll.u32 [#allocation5], 4
      %s41 = int_to_ptr.vmem [resolvable:$true] %s40
      %46 = dma.hbm_to_vmem [thread:$0]  %s5, 4096, %s41, [#allocation6], 64, 64, 4
    $region25: #{tpu_custom_call.1} parent=1 // pred_fallthru
      _
    // Predicated region
    $region26: #{tpu_custom_call.1} parent=1 // pred_check
      _
    $region27: #{tpu_custom_call.1} parent=1 // pred_check_branch
      %48 = sbr.rel (0) target = $region29
    $region28: #{tpu_custom_call.1} parent=1 // pred_region
      _
    $region29: #{tpu_custom_call.1} parent=1 // pred_fallthru
      _
    // Predicated region
    $region30: #{tpu_custom_call.1} parent=1 // pred_check
      _
    $region31: #{tpu_custom_call.1} parent=1 // pred_check_branch
      %50 = sbr.rel (0) target = $region33
    $region32: #{tpu_custom_call.1} parent=1 // pred_region
      %51 = dma.done [#allocation3], 4096
    $region33: #{tpu_custom_call.1} parent=1 // pred_fallthru
      _
    // Predicated region
    $region34: #{tpu_custom_call.1} parent=1 // pred_check
      _
    $region35: #{tpu_custom_call.1} parent=1 // pred_check_branch
      %53 = sbr.rel (0) target = $region37
    $region36: #{tpu_custom_call.1} parent=1 // pred_region
      %54 = dma.done [#allocation6], 4096
    $region37: #{tpu_custom_call.1} parent=1 // pred_fallthru
      _
    %v56 = vld [vmem:[%s0] sm:$0xff]
    %v57 = vld [vmem:[%s0 + $0x8] sm:$0xff]
    %v58 = vld [vmem:[%s1] sm:$0x1]
    %60 = vset.pattern.permute.xlu0 0
    %61 = vperm.xlu0 %60, %v56
    %v62 = vpop.permute.xlu0 %61
    %65 = vset.pattern.permute.xlu0 0
    %66 = vperm.xlu0 %65, %v57
    %v67 = vpop.permute.xlu0 %66
    %v70 = vlaneseq
    %v71 = vshrl.u32 %v70, 7
    %v72 = vsub.s32 0, %v71
    %v73 = vrot.slane %v58, %v72
    %v75 = vmul.f32 %v62, %v73
    %v76 = vmul.f32 %v67, %v73
    %v77 = vld [vmem:[%s2] sm:$0x1]
    %v79 = vlaneseq
    %v80 = vshrl.u32 %v79, 7
    %v81 = vsub.s32 0, %v80
    %v82 = vrot.slane %v77, %v81
    %v84 = vadd.f32 %v75, %v82
    %v85 = vadd.f32 %v76, %v82
    %v86 = vand.u32 2147483647, %v84
    %vm87 = vcmp.le.f32.partialorder %v86, 0.7853982
    %vm88 = vcmp.lt.s32.totalorder %v84, 0
    %v89 = vand.u32 %v84, 2139095040
    %v90 = vshrl.u32 %v89, 23
    %v91 = vsub.s32 %v90, 127
    %v92 = vand.u32 2147483647, %v84
    %v93 = vand.u32 %v92, 8388607
    %v94 = vor.u32 %v93, 8388608
    %v95 = vsub.s32 0, %v94
    %v96 = vadd.s32 %v91, 1
    %vm97 = vcmp.gt.s32.totalorder %v96, 0
    %v98 = vsel %vm97, %v96, 0
    %v99 = vshrl.u32 %v98, 5
    %v100 = vand.u32 %v98, 31
    %v101 = vsub.s32 32, %v100
    %v102 = vshrl.u32 683565275, %v101
    %v103 = vshll.u32 683565275, %v100
    %v104 = vshrl.u32 2475754826, %v101
    %v105 = vor.u32 %v103, %v104
    %v106 = vshll.u32 2475754826, %v100
    %v107 = vshrl.u32 2131351028, %v101
    %v108 = vor.u32 %v106, %v107
    %v109 = vshll.u32 2131351028, %v100
    %v110 = vshrl.u32 2102212464, %v101
    %v111 = vor.u32 %v109, %v110
    %v112 = vshll.u32 2102212464, %v100
    %v113 = vshrl.u32 920167782, %v101
    %v114 = vor.u32 %v112, %v113
    %v115 = vshll.u32 920167782, %v100
    %v116 = vshrl.u32 1326507024, %v101
    %v117 = vor.u32 %v115, %v116
    %vm118 = vcmp.lt.s32.totalorder %v99, 1
    %vm119 = vcmp.lt.s32.totalorder %v99, 2
    %vm120 = vcmp.lt.s32.totalorder %v99, 3
    %vm121 = vcmp.lt.s32.totalorder %v99, 4
    %v122 = vsel %vm118, %v102, %v105
    %v123 = vsel %vm121, %v111, 2102212464
    %v124 = vsel %vm120, %v108, %v123
    %v125 = vsel %vm119, %v122, %v124
    %v126 = vsel %vm118, %v105, %v108
    %v127 = vsel %vm121, %v114, 920167782
    %v128 = vsel %vm120, %v111, %v127
    %v129 = vsel %vm119, %v126, %v128
    %v130 = vsel %vm118, %v108, %v111
    %v131 = vsel %vm121, %v117, 1326507024
    %v132 = vsel %vm120, %v114, %v131
    %v133 = vsel %vm119, %v130, %v132
    %v134 = vshll.u32 %v94, 8
    %v135 = vmul.u32.u64.compose %v134, %v133
    %v136 = vextract.low.u32 %v135
    %v137 = vextract.high.u32 %v135
    %v138 = vmul.u32.u64.compose %v134, %v129
    %v139 = vextract.low.u32 %v138
    %v140 = vextract.high.u32 %v138
    %v141 = vmul.u32 %v134, %v125
    %v142 = vadd.s32 %v137, %v139
    %vm143 = vc.u32 %v137, %v139
    %v144 = vadd.s32 %v140, 1
    %v145 = vsel %vm143, %v144, %v140
    %v146 = vadd.s32 %v141, %v145
    %v147 = vadd.s32 %v146, 536870912
    %v148 = vshrl.u32 %v147, 30
    %v149 = vshll.u32 %v148, 30
    %v150 = vsub.s32 %v146, %v149
    %vm151 = vcmp.lt.s32.totalorder %v150, 0
    %v152 = vsub.s32 0, %v150
    %v153 = vsel %vm151, %v152, %v150
    %v154 = vclz %v153
    %v155 = vsub.s32 %v154, 2
    %vm156 = vcmp.gt.s32.totalorder 0, %v155
    %v157 = vsel %vm156, 0, %v155
    %v158 = vsub.s32 32, %v157
    %v159 = vshll.u32 %v150, %v157
    %v160 = vshrl.u32 %v142, %v158
    %v161 = vor.u32 %v159, %v160
    %v162 = vsub.s32 4294967266, %v157
    %v163 = vadd.s32 %v162, 127
    %v164 = vshll.u32 %v163, 23
    %v165 = vor.u32 4788187, %v164
    %v166 = vand.u32 2147483647, %v165
    %v168 = vcvt.s32.f32 %v161
    %v169 = vmul.f32 %v168, %v166
    %v170 = vxor.u32 %v169, 2147483648
    %v171 = vsel %vm88, %v170, %v169
    %v172 = vsub.s32 4, %v148
    %v173 = vsel %vm88, %v172, %v148
    %v174 = vsel %vm87, %v84, %v171
    %v175 = vsel %vm87, 0, %v173
    %v176 = vcosq.f32.pop %v174
    %v177 = vsinq.f32.pop %v174
    %vm178 = vweird.f32 %v84
    %v179 = vand.u32 %v175, 3
    %vm180 = vcmp.lt.s32.totalorder %v179, 2
    %vm181 = vcmp.eq.s32.totalorder %v179, 0
    %v182 = vxor.u32 %v177, 2147483648
    %v183 = vsel %vm181, %v176, %v182
    %vm184 = vcmp.eq.s32.totalorder %v179, 2
    %v185 = vxor.u32 %v176, 2147483648
    %v186 = vsel %vm184, %v185, %v177
    %v187 = vsel %vm180, %v183, %v186
    %v188 = vsel %vm178, nan, %v187
    %v189 = vand.u32 2147483647, %v85
    %vm190 = vcmp.le.f32.partialorder %v189, 0.7853982
    %vm191 = vcmp.lt.s32.totalorder %v85, 0
    %v192 = vand.u32 %v85, 2139095040
    %v193 = vshrl.u32 %v192, 23
    %v194 = vsub.s32 %v193, 127
    %v195 = vand.u32 2147483647, %v85
    %v196 = vand.u32 %v195, 8388607
    %v197 = vor.u32 %v196, 8388608
    %v198 = vsub.s32 0, %v197
    %v199 = vadd.s32 %v194, 1
    %vm200 = vcmp.gt.s32.totalorder %v199, 0
    %v201 = vsel %vm200, %v199, 0
    %v202 = vshrl.u32 %v201, 5
    %v203 = vand.u32 %v201, 31
    %v204 = vsub.s32 32, %v203
    %v205 = vshrl.u32 683565275, %v204
    %v206 = vshll.u32 683565275, %v203
    %v207 = vshrl.u32 2475754826, %v204
    %v208 = vor.u32 %v206, %v207
    %v209 = vshll.u32 2475754826, %v203
    %v210 = vshrl.u32 2131351028, %v204
    %v211 = vor.u32 %v209, %v210
    %v212 = vshll.u32 2131351028, %v203
    %v213 = vshrl.u32 2102212464, %v204
    %v214 = vor.u32 %v212, %v213
    %v215 = vshll.u32 2102212464, %v203
    %v216 = vshrl.u32 920167782, %v204
    %v217 = vor.u32 %v215, %v216
    %v218 = vshll.u32 920167782, %v203
    %v219 = vshrl.u32 1326507024, %v204
    %v220 = vor.u32 %v218, %v219
    %vm221 = vcmp.lt.s32.totalorder %v202, 1
    %vm222 = vcmp.lt.s32.totalorder %v202, 2
    %vm223 = vcmp.lt.s32.totalorder %v202, 3
    %vm224 = vcmp.lt.s32.totalorder %v202, 4
    %v225 = vsel %vm221, %v205, %v208
    %v226 = vsel %vm224, %v214, 2102212464
    %v227 = vsel %vm223, %v211, %v226
    %v228 = vsel %vm222, %v225, %v227
    %v229 = vsel %vm221, %v208, %v211
    %v230 = vsel %vm224, %v217, 920167782
    %v231 = vsel %vm223, %v214, %v230
    %v232 = vsel %vm222, %v229, %v231
    %v233 = vsel %vm221, %v211, %v214
    %v234 = vsel %vm224, %v220, 1326507024
    %v235 = vsel %vm223, %v217, %v234
    %v236 = vsel %vm222, %v233, %v235
    %v237 = vshll.u32 %v197, 8
    %v238 = vmul.u32.u64.compose %v237, %v236
    %v239 = vextract.low.u32 %v238
    %v240 = vextract.high.u32 %v238
    %v241 = vmul.u32.u64.compose %v237, %v232
    %v242 = vextract.low.u32 %v241
    %v243 = vextract.high.u32 %v241
    %v244 = vmul.u32 %v237, %v228
    %v245 = vadd.s32 %v240, %v242
    %vm246 = vc.u32 %v240, %v242
    %v247 = vadd.s32 %v243, 1
    %v248 = vsel %vm246, %v247, %v243
    %v249 = vadd.s32 %v244, %v248
    %v250 = vadd.s32 %v249, 536870912
    %v251 = vshrl.u32 %v250, 30
    %v252 = vshll.u32 %v251, 30
    %v253 = vsub.s32 %v249, %v252
    %vm254 = vcmp.lt.s32.totalorder %v253, 0
    %v255 = vsub.s32 0, %v253
    %v256 = vsel %vm254, %v255, %v253
    %v257 = vclz %v256
    %v258 = vsub.s32 %v257, 2
    %vm259 = vcmp.gt.s32.totalorder 0, %v258
    %v260 = vsel %vm259, 0, %v258
    %v261 = vsub.s32 32, %v260
    %v262 = vshll.u32 %v253, %v260
    %v263 = vshrl.u32 %v245, %v261
    %v264 = vor.u32 %v262, %v263
    %v265 = vsub.s32 4294967266, %v260
    %v266 = vadd.s32 %v265, 127
    %v267 = vshll.u32 %v266, 23
    %v268 = vor.u32 4788187, %v267
    %v269 = vand.u32 2147483647, %v268
    %v271 = vcvt.s32.f32 %v264
    %v272 = vmul.f32 %v271, %v269
    %v273 = vxor.u32 %v272, 2147483648
    %v274 = vsel %vm191, %v273, %v272
    %v275 = vsub.s32 4, %v251
    %v276 = vsel %vm191, %v275, %v251
    %v277 = vsel %vm190, %v85, %v274
    %v278 = vsel %vm190, 0, %v276
    %v279 = vcosq.f32.pop %v277
    %v280 = vsinq.f32.pop %v277
    %vm281 = vweird.f32 %v85
    %v282 = vand.u32 %v278, 3
    %vm283 = vcmp.lt.s32.totalorder %v282, 2
    %vm284 = vcmp.eq.s32.totalorder %v282, 0
    %v285 = vxor.u32 %v280, 2147483648
    %v286 = vsel %vm284, %v279, %v285
    %vm287 = vcmp.eq.s32.totalorder %v282, 2
    %v288 = vxor.u32 %v279, 2147483648
    %v289 = vsel %vm287, %v288, %v280
    %v290 = vsel %vm283, %v286, %v289
    %v291 = vsel %vm281, nan, %v290
    %v292 = vpack.c.bf16 %v291, %v188
    %v293 = vld [vmem:[#allocation2] sm:$0xff]
    %v294 = vld [vmem:[#allocation2 + $0x8] sm:$0xff]
    %v295 = vld [vmem:[#allocation2 + $0x10] sm:$0xff]
    %v296 = vld [vmem:[#allocation2 + $0x18] sm:$0xff]
    %v297 = vld [vmem:[#allocation2 + $0x20] sm:$0xff]
    %v298 = vld [vmem:[#allocation2 + $0x28] sm:$0xff]
    %v299 = vld [vmem:[#allocation2 + $0x30] sm:$0xff]
    %v300 = vld [vmem:[#allocation2 + $0x38] sm:$0xff]
    %v301 = vld [vmem:[#allocation2 + $0x40] sm:$0xff]
    %v302 = vld [vmem:[#allocation2 + $0x48] sm:$0xff]
    %v303 = vld [vmem:[#allocation2 + $0x50] sm:$0xff]
    %v304 = vld [vmem:[#allocation2 + $0x58] sm:$0xff]
    %v305 = vld [vmem:[#allocation2 + $0x60] sm:$0xff]
    %v306 = vld [vmem:[#allocation2 + $0x68] sm:$0xff]
    %v307 = vld [vmem:[#allocation2 + $0x70] sm:$0xff]
    %v308 = vld [vmem:[#allocation2 + $0x78] sm:$0xff]
    %v309 = vld [vmem:[#allocation2 + $0x80] sm:$0xff]
    %v310 = vld [vmem:[#allocation2 + $0x88] sm:$0xff]
    %v311 = vld [vmem:[#allocation2 + $0x90] sm:$0xff]
    %v312 = vld [vmem:[#allocation2 + $0x98] sm:$0xff]
    %v313 = vld [vmem:[#allocation2 + $0xa0] sm:$0xff]
    %v314 = vld [vmem:[#allocation2 + $0xa8] sm:$0xff]
    %v315 = vld [vmem:[#allocation2 + $0xb0] sm:$0xff]
    %v316 = vld [vmem:[#allocation2 + $0xb8] sm:$0xff]
    %v317 = vld [vmem:[#allocation2 + $0xc0] sm:$0xff]
    %v318 = vld [vmem:[#allocation2 + $0xc8] sm:$0xff]
    %v319 = vld [vmem:[#allocation2 + $0xd0] sm:$0xff]
    %v320 = vld [vmem:[#allocation2 + $0xd8] sm:$0xff]
    %v321 = vld [vmem:[#allocation2 + $0xe0] sm:$0xff]
    %v322 = vld [vmem:[#allocation2 + $0xe8] sm:$0xff]
    %v323 = vld [vmem:[#allocation2 + $0xf0] sm:$0xff]
    %v324 = vld [vmem:[#allocation2 + $0xf8] sm:$0xff]
    %v325 = vld [vmem:[%s4] sm:$0xf]
    %v327 = vlaneseq
    %v328 = vshrl.u32 %v327, 7
    %v329 = vsub.s32 0, %v328
    %v330 = vrot.slane %v325, %v329
    %v331 = vlaneseq
    %v332 = vshrl.u32 %v331, 7
    %v333 = vsub.s32 1, %v332
    %v334 = vrot.slane %v325, %v333
    %v335 = vlaneseq
    %v336 = vshrl.u32 %v335, 7
    %v337 = vsub.s32 2, %v336
    %v338 = vrot.slane %v325, %v337
    %v339 = vlaneseq
    %v340 = vshrl.u32 %v339, 7
    %v341 = vsub.s32 3, %v340
    %v342 = vrot.slane %v325, %v341
    %v379 = vunpack.c.l.b16 %v293
    %v380 = vunpack.c.h.b16 %v293
    %v381 = vunpack.c.l.b16 %v294
    %v382 = vunpack.c.h.b16 %v294
    %v383 = vunpack.c.l.b16 %v295
    %v384 = vunpack.c.h.b16 %v295
    %v385 = vunpack.c.l.b16 %v296
    %v386 = vunpack.c.h.b16 %v296
    %v387 = vunpack.c.l.b16 %v297
    %v388 = vunpack.c.h.b16 %v297
    %v389 = vunpack.c.l.b16 %v298
    %v390 = vunpack.c.h.b16 %v298
    %v391 = vunpack.c.l.b16 %v299
    %v392 = vunpack.c.h.b16 %v299
    %v393 = vunpack.c.l.b16 %v300
    %v394 = vunpack.c.h.b16 %v300
    %v395 = vunpack.c.l.b16 %v301
    %v396 = vunpack.c.h.b16 %v301
    %v397 = vunpack.c.l.b16 %v302
    %v398 = vunpack.c.h.b16 %v302
    %v399 = vunpack.c.l.b16 %v303
    %v400 = vunpack.c.h.b16 %v303
    %v401 = vunpack.c.l.b16 %v304
    %v402 = vunpack.c.h.b16 %v304
    %v403 = vunpack.c.l.b16 %v305
    %v404 = vunpack.c.h.b16 %v305
    %v405 = vunpack.c.l.b16 %v306
    %v406 = vunpack.c.h.b16 %v306
    %v407 = vunpack.c.l.b16 %v307
    %v408 = vunpack.c.h.b16 %v307
    %v409 = vunpack.c.l.b16 %v308
    %v410 = vunpack.c.h.b16 %v308
    %v411 = vunpack.c.l.b16 %v309
    %v412 = vunpack.c.h.b16 %v309
    %v413 = vunpack.c.l.b16 %v310
    %v414 = vunpack.c.h.b16 %v310
    %v415 = vunpack.c.l.b16 %v311
    %v416 = vunpack.c.h.b16 %v311
    %v417 = vunpack.c.l.b16 %v312
    %v418 = vunpack.c.h.b16 %v312
    %v419 = vunpack.c.l.b16 %v313
    %v420 = vunpack.c.h.b16 %v313
    %v421 = vunpack.c.l.b16 %v314
    %v422 = vunpack.c.h.b16 %v314
    %v423 = vunpack.c.l.b16 %v315
    %v424 = vunpack.c.h.b16 %v315
    %v425 = vunpack.c.l.b16 %v316
    %v426 = vunpack.c.h.b16 %v316
    %v427 = vunpack.c.l.b16 %v317
    %v428 = vunpack.c.h.b16 %v317
    %v429 = vunpack.c.l.b16 %v318
    %v430 = vunpack.c.h.b16 %v318
    %v431 = vunpack.c.l.b16 %v319
    %v432 = vunpack.c.h.b16 %v319
    %v433 = vunpack.c.l.b16 %v320
    %v434 = vunpack.c.h.b16 %v320
    %v435 = vunpack.c.l.b16 %v321
    %v436 = vunpack.c.h.b16 %v321
    %v437 = vunpack.c.l.b16 %v322
    %v438 = vunpack.c.h.b16 %v322
    %v439 = vunpack.c.l.b16 %v323
    %v440 = vunpack.c.h.b16 %v323
    %v441 = vunpack.c.l.b16 %v324
    %v442 = vunpack.c.h.b16 %v324
    %v443 = vpack.c.b16 %v383, %v379
    %v444 = vpack.c.b16 %v384, %v380
    %v445 = vpack.c.b16 %v385, %v381
    %v446 = vpack.c.b16 %v386, %v382
    %v447 = vpack.c.b16 %v391, %v387
    %v448 = vpack.c.b16 %v392, %v388
    %v449 = vpack.c.b16 %v393, %v389
    %v450 = vpack.c.b16 %v394, %v390
    %v451 = vpack.c.b16 %v399, %v395
    %v452 = vpack.c.b16 %v400, %v396
    %v453 = vpack.c.b16 %v401, %v397
    %v454 = vpack.c.b16 %v402, %v398
    %v455 = vpack.c.b16 %v407, %v403
    %v456 = vpack.c.b16 %v408, %v404
    %v457 = vpack.c.b16 %v409, %v405
    %v458 = vpack.c.b16 %v410, %v406
    %v459 = vpack.c.b16 %v415, %v411
    %v460 = vpack.c.b16 %v416, %v412
    %v461 = vpack.c.b16 %v417, %v413
    %v462 = vpack.c.b16 %v418, %v414
    %v463 = vpack.c.b16 %v423, %v419
    %v464 = vpack.c.b16 %v424, %v420
    %v465 = vpack.c.b16 %v425, %v421
    %v466 = vpack.c.b16 %v426, %v422
    %v467 = vpack.c.b16 %v431, %v427
    %v468 = vpack.c.b16 %v432, %v428
    %v469 = vpack.c.b16 %v433, %v429
    %v470 = vpack.c.b16 %v434, %v430
    %v471 = vpack.c.b16 %v439, %v435
    %v472 = vpack.c.b16 %v440, %v436
    %v473 = vpack.c.b16 %v441, %v437
    %v474 = vpack.c.b16 %v442, %v438
    %507 = vmatprep.subr.bf16.mxu0 %v444
    %508 = vmatpush1.bf16.msra.mxu0 %v443
    %509 = vmatprep.subr.bf16.mxu0 %v448
    %510 = vmatpush1.bf16.msra.mxu0 %v447
    %511 = vmatprep.subr.bf16.mxu0 %v452
    %512 = vmatpush1.bf16.msra.mxu0 %v451
    %513 = vmatprep.subr.bf16.mxu0 %v456
    %514 = vmatpush1.bf16.msra.mxu0 %v455
    %515 = vmatprep.subr.bf16.mxu0 %v460
    %516 = vmatpush1.bf16.msra.mxu0 %v459
    %517 = vmatprep.subr.bf16.mxu0 %v464
    %518 = vmatpush1.bf16.msra.mxu0 %v463
    %519 = vmatprep.subr.bf16.mxu0 %v468
    %520 = vmatpush1.bf16.msra.mxu0 %v467
    %521 = vmatprep.subr.bf16.mxu0 %v472
    %522 = vmatpush1.bf16.msra.mxu0 %v471
    %523 = vmatprep.subr.bf16.mxu0 0
    %524 = vmatpush1.bf16.msra.mxu0 0
    %525 = vmatprep.subr.bf16.mxu0 0
    %526 = vmatpush1.bf16.msra.mxu0 0
    %527 = vmatprep.subr.bf16.mxu0 0
    %528 = vmatpush1.bf16.msra.mxu0 0
    %529 = vmatprep.subr.bf16.mxu0 0
    %530 = vmatpush1.bf16.msra.mxu0 0
    %531 = vmatprep.subr.bf16.mxu0 0
    %532 = vmatpush1.bf16.msra.mxu0 0
    %533 = vmatprep.subr.bf16.mxu0 0
    %534 = vmatpush1.bf16.msra.mxu0 0
    %535 = vmatprep.subr.bf16.mxu0 0
    %536 = vmatpush1.bf16.msra.mxu0 0
    %537 = vmatprep.subr.bf16.mxu0 0
    %538 = vmatpush1.bf16.msra.mxu0 0
    %539 = vmatprep.mubr.bf16.mxu0 0
    %540 = vmatmul.mubr.bf16.gmra.mrb[0].mxu0 %v292
    %v541 = vpop.f32.mrb[0].mxu0
    %v542 = vadd.f32 %v330, %v541
    %v543 = vpop.f32.mrb[0].mxu0
    %v544 = vadd.f32 %v334, %v543
    %v545 = vpop.f32.mrb[0].mxu0
    %v546 = vadd.f32 %v330, %v545
    %v547 = vpop.f32.mrb[0].mxu0
    %v548 = vadd.f32 %v334, %v547
    %549 = vdwg.mxu0
    %550 = vmatprep.subr.bf16.mxu0 %v446
    %551 = vmatpush1.bf16.msra.mxu0 %v445
    %552 = vmatprep.subr.bf16.mxu0 %v450
    %553 = vmatpush1.bf16.msra.mxu0 %v449
    %554 = vmatprep.subr.bf16.mxu0 %v454
    %555 = vmatpush1.bf16.msra.mxu0 %v453
    %556 = vmatprep.subr.bf16.mxu0 %v458
    %557 = vmatpush1.bf16.msra.mxu0 %v457
    %558 = vmatprep.subr.bf16.mxu0 %v462
    %559 = vmatpush1.bf16.msra.mxu0 %v461
    %560 = vmatprep.subr.bf16.mxu0 %v466
    %561 = vmatpush1.bf16.msra.mxu0 %v465
    %562 = vmatprep.subr.bf16.mxu0 %v470
    %563 = vmatpush1.bf16.msra.mxu0 %v469
    %564 = vmatprep.subr.bf16.mxu0 %v474
    %565 = vmatpush1.bf16.msra.mxu0 %v473
    %566 = vmatprep.subr.bf16.mxu0 0
    %567 = vmatpush1.bf16.msra.mxu0 0
    %568 = vmatprep.subr.bf16.mxu0 0
    %569 = vmatpush1.bf16.msra.mxu0 0
    %570 = vmatprep.subr.bf16.mxu0 0
    %571 = vmatpush1.bf16.msra.mxu0 0
    %572 = vmatprep.subr.bf16.mxu0 0
    %573 = vmatpush1.bf16.msra.mxu0 0
    %574 = vmatprep.subr.bf16.mxu0 0
    %575 = vmatpush1.bf16.msra.mxu0 0
    %576 = vmatprep.subr.bf16.mxu0 0
    %577 = vmatpush1.bf16.msra.mxu0 0
    %578 = vmatprep.subr.bf16.mxu0 0
    %579 = vmatpush1.bf16.msra.mxu0 0
    %580 = vmatprep.subr.bf16.mxu0 0
    %581 = vmatpush1.bf16.msra.mxu0 0
    %582 = vmatprep.mubr.bf16.mxu0 0
    %583 = vmatmul.mubr.bf16.gmra.mrb[0].mxu0 %v292
    %v584 = vpop.f32.mrb[0].mxu0
    %v585 = vadd.f32 %v338, %v584
    %v586 = vpop.f32.mrb[0].mxu0
    %v587 = vadd.f32 %v342, %v586
    %v588 = vpop.f32.mrb[0].mxu0
    %v589 = vadd.f32 %v338, %v588
    %v590 = vpop.f32.mrb[0].mxu0
    %v591 = vadd.f32 %v342, %v590
    %592 = vdwg.mxu0
    %v593 = vsub.f32 0.0, %v542
    %v594 = vsub.f32 0.0, %v544
    %v595 = vsub.f32 0.0, %v585
    %v596 = vsub.f32 0.0, %v587
    %v597 = vsub.f32 0.0, %v546
    %v598 = vsub.f32 0.0, %v548
    %v599 = vsub.f32 0.0, %v589
    %v600 = vsub.f32 0.0, %v591
    %v601 = vmul.f32 %v593, 1.442695
    %v602 = vpow.pop %v601
    %v603 = vmul.f32 %v594, 1.442695
    %v604 = vpow.pop %v603
    %v605 = vmul.f32 %v595, 1.442695
    %v606 = vpow.pop %v605
    %v607 = vmul.f32 %v596, 1.442695
    %v608 = vpow.pop %v607
    %v609 = vmul.f32 %v597, 1.442695
    %v610 = vpow.pop %v609
    %v611 = vmul.f32 %v598, 1.442695
    %v612 = vpow.pop %v611
    %v613 = vmul.f32 %v599, 1.442695
    %v614 = vpow.pop %v613
    %v615 = vmul.f32 %v600, 1.442695
    %v616 = vpow.pop %v615
    %v617 = vadd.f32 %v602, 1.0
    %v618 = vadd.f32 %v604, 1.0
    %v619 = vadd.f32 %v606, 1.0
    %v620 = vadd.f32 %v608, 1.0
    %v621 = vadd.f32 %v610, 1.0
    %v622 = vadd.f32 %v612, 1.0
    %v623 = vadd.f32 %v614, 1.0
    %v624 = vadd.f32 %v616, 1.0
    %v625 = vrcp.pop %v617
    %v626 = vrcp.pop %v618
    %v627 = vrcp.pop %v619
    %v628 = vrcp.pop %v620
    %v629 = vrcp.pop %v621
    %v630 = vrcp.pop %v622
    %v631 = vrcp.pop %v623
    %v632 = vrcp.pop %v624
    %v633 = vmul.f32 %v542, %v625
    %v634 = vmul.f32 %v544, %v626
    %v635 = vmul.f32 %v585, %v627
    %v636 = vmul.f32 %v587, %v628
    %v637 = vmul.f32 %v546, %v629
    %v638 = vmul.f32 %v548, %v630
    %v639 = vmul.f32 %v589, %v631
    %v640 = vmul.f32 %v591, %v632
    %v641 = vpack.c.bf16 %v637, %v633
    %v642 = vpack.c.bf16 %v638, %v634
    %v643 = vpack.c.bf16 %v639, %v635
    %v644 = vpack.c.bf16 %v640, %v636
    %v645 = vld [vmem:[#allocation5] sm:$0xf]
    %v646 = vld [vmem:[#allocation5 + $0x4] sm:$0xf]
    %v647 = vld [vmem:[#allocation5 + $0x8] sm:$0xf]
    %v648 = vld [vmem:[#allocation5 + $0xc] sm:$0xf]
    %v649 = vld [vmem:[#allocation5 + $0x10] sm:$0xf]
    %v650 = vld [vmem:[#allocation5 + $0x14] sm:$0xf]
    %v651 = vld [vmem:[#allocation5 + $0x18] sm:$0xf]
    %v652 = vld [vmem:[#allocation5 + $0x1c] sm:$0xf]
    %v653 = vld [vmem:[#allocation5 + $0x20] sm:$0xf]
    %v654 = vld [vmem:[#allocation5 + $0x24] sm:$0xf]
    %v655 = vld [vmem:[#allocation5 + $0x28] sm:$0xf]
    %v656 = vld [vmem:[#allocation5 + $0x2c] sm:$0xf]
    %v657 = vld [vmem:[#allocation5 + $0x30] sm:$0xf]
    %v658 = vld [vmem:[#allocation5 + $0x34] sm:$0xf]
    %v659 = vld [vmem:[#allocation5 + $0x38] sm:$0xf]
    %v660 = vld [vmem:[#allocation5 + $0x3c] sm:$0xf]
    %v661 = vld [vmem:[#allocation5 + $0x40] sm:$0xf]
    %v662 = vld [vmem:[#allocation5 + $0x44] sm:$0xf]
    %v663 = vld [vmem:[#allocation5 + $0x48] sm:$0xf]
    %v664 = vld [vmem:[#allocation5 + $0x4c] sm:$0xf]
    %v665 = vld [vmem:[#allocation5 + $0x50] sm:$0xf]
    %v666 = vld [vmem:[#allocation5 + $0x54] sm:$0xf]
    %v667 = vld [vmem:[#allocation5 + $0x58] sm:$0xf]
    %v668 = vld [vmem:[#allocation5 + $0x5c] sm:$0xf]
    %v669 = vld [vmem:[#allocation5 + $0x60] sm:$0xf]
    %v670 = vld [vmem:[#allocation5 + $0x64] sm:$0xf]
    %v671 = vld [vmem:[#allocation5 + $0x68] sm:$0xf]
    %v672 = vld [vmem:[#allocation5 + $0x6c] sm:$0xf]
    %v673 = vld [vmem:[#allocation5 + $0x70] sm:$0xf]
    %v674 = vld [vmem:[#allocation5 + $0x74] sm:$0xf]
    %v675 = vld [vmem:[#allocation5 + $0x78] sm:$0xf]
    %v676 = vld [vmem:[#allocation5 + $0x7c] sm:$0xf]
    %v677 = vld [vmem:[#allocation5 + $0x80] sm:$0xf]
    %v678 = vld [vmem:[#allocation5 + $0x84] sm:$0xf]
    %v679 = vld [vmem:[#allocation5 + $0x88] sm:$0xf]
    %v680 = vld [vmem:[#allocation5 + $0x8c] sm:$0xf]
    %v681 = vld [vmem:[#allocation5 + $0x90] sm:$0xf]
    %v682 = vld [vmem:[#allocation5 + $0x94] sm:$0xf]
    %v683 = vld [vmem:[#allocation5 + $0x98] sm:$0xf]
    %v684 = vld [vmem:[#allocation5 + $0x9c] sm:$0xf]
    %v685 = vld [vmem:[#allocation5 + $0xa0] sm:$0xf]
    %v686 = vld [vmem:[#allocation5 + $0xa4] sm:$0xf]
    %v687 = vld [vmem:[#allocation5 + $0xa8] sm:$0xf]
    %v688 = vld [vmem:[#allocation5 + $0xac] sm:$0xf]
    %v689 = vld [vmem:[#allocation5 + $0xb0] sm:$0xf]
    %v690 = vld [vmem:[#allocation5 + $0xb4] sm:$0xf]
    %v691 = vld [vmem:[#allocation5 + $0xb8] sm:$0xf]
    %v692 = vld [vmem:[#allocation5 + $0xbc] sm:$0xf]
    %v693 = vld [vmem:[#allocation5 + $0xc0] sm:$0xf]
    %v694 = vld [vmem:[#allocation5 + $0xc4] sm:$0xf]
    %v695 = vld [vmem:[#allocation5 + $0xc8] sm:$0xf]
    %v696 = vld [vmem:[#allocation5 + $0xcc] sm:$0xf]
    %v697 = vld [vmem:[#allocation5 + $0xd0] sm:$0xf]
    %v698 = vld [vmem:[#allocation5 + $0xd4] sm:$0xf]
    %v699 = vld [vmem:[#allocation5 + $0xd8] sm:$0xf]
    %v700 = vld [vmem:[#allocation5 + $0xdc] sm:$0xf]
    %v701 = vld [vmem:[#allocation5 + $0xe0] sm:$0xf]
    %v702 = vld [vmem:[#allocation5 + $0xe4] sm:$0xf]
    %v703 = vld [vmem:[#allocation5 + $0xe8] sm:$0xf]
    %v704 = vld [vmem:[#allocation5 + $0xec] sm:$0xf]
    %v705 = vld [vmem:[#allocation5 + $0xf0] sm:$0xf]
    %v706 = vld [vmem:[#allocation5 + $0xf4] sm:$0xf]
    %v707 = vld [vmem:[#allocation5 + $0xf8] sm:$0xf]
    %v708 = vld [vmem:[#allocation5 + $0xfc] sm:$0xf]
    %v709 = vld [vmem:[%s6] sm:$0x1]
    %v711 = vlaneseq
    %v712 = vshrl.u32 %v711, 7
    %v713 = vsub.s32 0, %v712
    %v714 = vrot.slane %v709, %v713
    %v780 = vunpack.c.l.b16 %v645
    %v781 = vunpack.c.l.b16 %v646
    %v782 = vunpack.c.l.b16 %v647
    %v783 = vunpack.c.l.b16 %v648
    %v784 = vunpack.c.l.b16 %v649
    %v785 = vunpack.c.l.b16 %v650
    %v786 = vunpack.c.l.b16 %v651
    %v787 = vunpack.c.l.b16 %v652
    %v788 = vunpack.c.l.b16 %v653
    %v789 = vunpack.c.l.b16 %v654
    %v790 = vunpack.c.l.b16 %v655
    %v791 = vunpack.c.l.b16 %v656
    %v792 = vunpack.c.l.b16 %v657
    %v793 = vunpack.c.l.b16 %v658
    %v794 = vunpack.c.l.b16 %v659
    %v795 = vunpack.c.l.b16 %v660
    %v796 = vunpack.c.l.b16 %v661
    %v797 = vunpack.c.l.b16 %v662
    %v798 = vunpack.c.l.b16 %v663
    %v799 = vunpack.c.l.b16 %v664
    %v800 = vunpack.c.l.b16 %v665
    %v801 = vunpack.c.l.b16 %v666
    %v802 = vunpack.c.l.b16 %v667
    %v803 = vunpack.c.l.b16 %v668
    %v804 = vunpack.c.l.b16 %v669
    %v805 = vunpack.c.l.b16 %v670
    %v806 = vunpack.c.l.b16 %v671
    %v807 = vunpack.c.l.b16 %v672
    %v808 = vunpack.c.l.b16 %v673
    %v809 = vunpack.c.l.b16 %v674
    %v810 = vunpack.c.l.b16 %v675
    %v811 = vunpack.c.l.b16 %v676
    %v812 = vunpack.c.l.b16 %v677
    %v813 = vunpack.c.l.b16 %v678
    %v814 = vunpack.c.l.b16 %v679
    %v815 = vunpack.c.l.b16 %v680
    %v816 = vunpack.c.l.b16 %v681
    %v817 = vunpack.c.l.b16 %v682
    %v818 = vunpack.c.l.b16 %v683
    %v819 = vunpack.c.l.b16 %v684
    %v820 = vunpack.c.l.b16 %v685
    %v821 = vunpack.c.l.b16 %v686
    %v822 = vunpack.c.l.b16 %v687
    %v823 = vunpack.c.l.b16 %v688
    %v824 = vunpack.c.l.b16 %v689
    %v825 = vunpack.c.l.b16 %v690
    %v826 = vunpack.c.l.b16 %v691
    %v827 = vunpack.c.l.b16 %v692
    %v828 = vunpack.c.l.b16 %v693
    %v829 = vunpack.c.l.b16 %v694
    %v830 = vunpack.c.l.b16 %v695
    %v831 = vunpack.c.l.b16 %v696
    %v832 = vunpack.c.l.b16 %v697
    %v833 = vunpack.c.l.b16 %v698
    %v834 = vunpack.c.l.b16 %v699
    %v835 = vunpack.c.l.b16 %v700
    %v836 = vunpack.c.l.b16 %v701
    %v837 = vunpack.c.l.b16 %v702
    %v838 = vunpack.c.l.b16 %v703
    %v839 = vunpack.c.l.b16 %v704
    %v840 = vunpack.c.l.b16 %v705
    %v841 = vunpack.c.l.b16 %v706
    %v842 = vunpack.c.l.b16 %v707
    %v843 = vunpack.c.l.b16 %v708
    %v844 = vpack.c.b16 %v781, %v780
    %v845 = vpack.c.b16 %v783, %v782
    %v846 = vpack.c.b16 %v785, %v784
    %v847 = vpack.c.b16 %v787, %v786
    %v848 = vpack.c.b16 %v789, %v788
    %v849 = vpack.c.b16 %v791, %v790
    %v850 = vpack.c.b16 %v793, %v792
    %v851 = vpack.c.b16 %v795, %v794
    %v852 = vpack.c.b16 %v797, %v796
    %v853 = vpack.c.b16 %v799, %v798
    %v854 = vpack.c.b16 %v801, %v800
    %v855 = vpack.c.b16 %v803, %v802
    %v856 = vpack.c.b16 %v805, %v804
    %v857 = vpack.c.b16 %v807, %v806
    %v858 = vpack.c.b16 %v809, %v808
    %v859 = vpack.c.b16 %v811, %v810
    %v860 = vpack.c.b16 %v813, %v812
    %v861 = vpack.c.b16 %v815, %v814
    %v862 = vpack.c.b16 %v817, %v816
    %v863 = vpack.c.b16 %v819, %v818
    %v864 = vpack.c.b16 %v821, %v820
    %v865 = vpack.c.b16 %v823, %v822
    %v866 = vpack.c.b16 %v825, %v824
    %v867 = vpack.c.b16 %v827, %v826
    %v868 = vpack.c.b16 %v829, %v828
    %v869 = vpack.c.b16 %v831, %v830
    %v870 = vpack.c.b16 %v833, %v832
    %v871 = vpack.c.b16 %v835, %v834
    %v872 = vpack.c.b16 %v837, %v836
    %v873 = vpack.c.b16 %v839, %v838
    %v874 = vpack.c.b16 %v841, %v840
    %v875 = vpack.c.b16 %v843, %v842
    %908 = vmatprep.subr.bf16.mxu0 0
    %909 = vmatpush1.bf16.msra.mxu0 %v844
    %910 = vmatprep.subr.bf16.mxu0 0
    %911 = vmatpush1.bf16.msra.mxu0 %v845
    %912 = vmatprep.subr.bf16.mxu0 0
    %913 = vmatpush1.bf16.msra.mxu0 %v846
    %914 = vmatprep.subr.bf16.mxu0 0
    %915 = vmatpush1.bf16.msra.mxu0 %v847
    %916 = vmatprep.subr.bf16.mxu0 0
    %917 = vmatpush1.bf16.msra.mxu0 %v848
    %918 = vmatprep.subr.bf16.mxu0 0
    %919 = vmatpush1.bf16.msra.mxu0 %v849
    %920 = vmatprep.subr.bf16.mxu0 0
    %921 = vmatpush1.bf16.msra.mxu0 %v850
    %922 = vmatprep.subr.bf16.mxu0 0
    %923 = vmatpush1.bf16.msra.mxu0 %v851
    %924 = vmatprep.subr.bf16.mxu0 0
    %925 = vmatpush1.bf16.msra.mxu0 %v852
    %926 = vmatprep.subr.bf16.mxu0 0
    %927 = vmatpush1.bf16.msra.mxu0 %v853
    %928 = vmatprep.subr.bf16.mxu0 0
    %929 = vmatpush1.bf16.msra.mxu0 %v854
    %930 = vmatprep.subr.bf16.mxu0 0
    %931 = vmatpush1.bf16.msra.mxu0 %v855
    %932 = vmatprep.subr.bf16.mxu0 0
    %933 = vmatpush1.bf16.msra.mxu0 %v856
    %934 = vmatprep.subr.bf16.mxu0 0
    %935 = vmatpush1.bf16.msra.mxu0 %v857
    %936 = vmatprep.subr.bf16.mxu0 0
    %937 = vmatpush1.bf16.msra.mxu0 %v858
    %938 = vmatprep.subr.bf16.mxu0 0
    %939 = vmatpush1.bf16.msra.mxu0 %v859
    %940 = vmatprep.mubr.bf16.mxu0 %v642
    %941 = vmatmul.mubr.bf16.gmra.mrb[0].mxu0 %v641
    %v942 = vpop.f32.mrb[0].mxu0
    %v943 = vadd.f32 %v714, %v942
    %v944 = vpop.f32.mrb[0].mxu0
    %v945 = vpop.f32.mrb[0].mxu0
    %v946 = vadd.f32 %v714, %v945
    %v947 = vpop.f32.mrb[0].mxu0
    %948 = vdwg.mxu0
    %949 = vmatprep.subr.bf16.mxu0 0
    %950 = vmatpush1.bf16.msra.mxu0 %v860
    %951 = vmatprep.subr.bf16.mxu0 0
    %952 = vmatpush1.bf16.msra.mxu0 %v861
    %953 = vmatprep.subr.bf16.mxu0 0
    %954 = vmatpush1.bf16.msra.mxu0 %v862
    %955 = vmatprep.subr.bf16.mxu0 0
    %956 = vmatpush1.bf16.msra.mxu0 %v863
    %957 = vmatprep.subr.bf16.mxu0 0
    %958 = vmatpush1.bf16.msra.mxu0 %v864
    %959 = vmatprep.subr.bf16.mxu0 0
    %960 = vmatpush1.bf16.msra.mxu0 %v865
    %961 = vmatprep.subr.bf16.mxu0 0
    %962 = vmatpush1.bf16.msra.mxu0 %v866
    %963 = vmatprep.subr.bf16.mxu0 0
    %964 = vmatpush1.bf16.msra.mxu0 %v867
    %965 = vmatprep.subr.bf16.mxu0 0
    %966 = vmatpush1.bf16.msra.mxu0 %v868
    %967 = vmatprep.subr.bf16.mxu0 0
    %968 = vmatpush1.bf16.msra.mxu0 %v869
    %969 = vmatprep.subr.bf16.mxu0 0
    %970 = vmatpush1.bf16.msra.mxu0 %v870
    %971 = vmatprep.subr.bf16.mxu0 0
    %972 = vmatpush1.bf16.msra.mxu0 %v871
    %973 = vmatprep.subr.bf16.mxu0 0
    %974 = vmatpush1.bf16.msra.mxu0 %v872
    %975 = vmatprep.subr.bf16.mxu0 0
    %976 = vmatpush1.bf16.msra.mxu0 %v873
    %977 = vmatprep.subr.bf16.mxu0 0
    %978 = vmatpush1.bf16.msra.mxu0 %v874
    %979 = vmatprep.subr.bf16.mxu0 0
    %980 = vmatpush1.bf16.msra.mxu0 %v875
    %981 = vmatprep.mubr.bf16.mxu0 %v644
    %982 = vmatmul.mubr.bf16.gmra.mrb[0].mxu0 %v643
    %v983 = vpop.f32.mrb[0].mxu0
    %v984 = vadd.f32 %v943, %v983
    %v985 = vpop.f32.mrb[0].mxu0
    %v986 = vpop.f32.mrb[0].mxu0
    %v987 = vadd.f32 %v946, %v986
    %v988 = vpop.f32.mrb[0].mxu0
    %989 = vdwg.mxu0
    %990 = vst [vmem:[#allocation7] sm:$0xff] %v984
    %991 = vst [vmem:[#allocation7 + $0x8] sm:$0xff] %v987
    // Predicated region
    $region38: #{tpu_custom_call.1} parent=1 // pred_check
      _
    $region39: #{tpu_custom_call.1} parent=1 // pred_check_branch
      %993 = sbr.rel (0) target = $region41
    $region40: #{tpu_custom_call.1} parent=1 // pred_region
      %s995 = ssub.s32 256, 256
      %996 = vsyncadd [#allocation4], %s995
      %s997 = sshll.u32 [#allocation7], 4
      %s998 = int_to_ptr.vmem [resolvable:$true] %s997
      %1003 = dma.vmem_to_hbm [thread:$0]  %s998, 256, %s7, [#allocation4], 128, 128, 8
    $region41: #{tpu_custom_call.1} parent=1 // pred_fallthru
      _
    // Predicated region
    $region42: #{tpu_custom_call.1} parent=1 // pred_check
      _
    $region43: #{tpu_custom_call.1} parent=1 // pred_check_branch
      %1005 = sbr.rel (0) target = $region45
    $region44: #{tpu_custom_call.1} parent=1 // pred_region
      %1006 = dma.done [#allocation4], 256
    $region45: #{tpu_custom_call.1} parent=1 // pred_fallthru
      _
    %1007 = vsyncpa [#allocation3], 1
    %1008 = vsyncpa [#allocation6], 1
    %1009 = vsyncpa [#allocation4], 1

</llo_original>
